<compile_context>
chip_gen: v7x
topology: tpu7x:2x2x1
jax: 0.10.0
libtpu: 0.0.40
codegen_flags: <defaults>
</compile_context>

<pallas_src>
import jax
import jax.numpy as jnp
from jax.experimental import pallas as pl
from jax.experimental.pallas import tpu as pltpu


# Double-buffered per-call VMEM budget for the batch tile, and the scoped-VMEM
# limit we request (valid on v5e/v6e/v7x; v5e's default is only 16 MiB).
_VMEM_TILE_BUDGET_BYTES = 20 * 1024 * 1024
_VMEM_LIMIT_BYTES = 32 * 1024 * 1024


def _make_branch_kernel(has_pa: bool):
    """Fused decision-node forward for one batch tile.

    Inputs : xs (TB, D), w (D, 1), b (1,) in SMEM, [pa (TB, 1)],
             l_dists (TB, K), r_dists (TB, K)
    Output : (TB, K+3) slab = [ (1-ps)*l + ps*r | ps | pa_l | pa_r ]
    """

    def kernel(*refs):
        if has_pa:
            xs_ref, w_ref, b_ref, pa_ref, ld_ref, rd_ref, out_ref = refs
        else:
            xs_ref, w_ref, b_ref, ld_ref, rd_ref, out_ref = refs
            pa_ref = None

        # g(xs) = sigmoid(xs @ w + b).  xs stays in its native dtype (bf16 is
        # MXU-native); accumulation is f32.  Bias comes off the scalar path.
        logit = jnp.dot(xs_ref[...], w_ref[...],
                        preferred_element_type=jnp.float32)
        ps = jax.nn.sigmoid(logit + b_ref[0])               # (TB, 1) f32
        omp = 1.0 - ps

        if has_pa:
            pa = pa_ref[...].astype(jnp.float32)
            pa_l = omp * pa
            pa_r = ps * pa
        else:                                                # pa defaults to 1
            pa_l = omp
            pa_r = ps

        mixed = (omp * ld_ref[...].astype(jnp.float32)
                 + ps * rd_ref[...].astype(jnp.float32))     # (TB, K) f32

        # Single lane-packed output slab: one store / one output DMA stream.
        out_ref[...] = jnp.concatenate([mixed, ps, pa_l, pa_r],
                                       axis=1).astype(out_ref.dtype)

    return kernel


def _pick_batch_tile(bs: int, per_row_bytes: int) -> int:
    """Largest batch tile that fits the double-buffered VMEM budget; for
    moderate batches split into >=2 grid steps so both TensorCores (v7x
    megacore) get work on this memory-bound kernel."""
    rows = _VMEM_TILE_BUDGET_BYTES // max(per_row_bytes, 1)
    rows = max(8, (rows // 8) * 8)
    if bs <= rows:
        if bs >= 16:
            half = ((-(-bs // 2)) + 7) // 8 * 8   # round8(ceil(bs/2))
            return min(half, bs)
        return bs                                  # tiny batch: full-dim block
    return rows


def branch_forward(xs, w, b, l_dists, r_dists, pa=None):
    """JAX/Pallas equivalent of Branch.forward with g(xs) = sigmoid(xs @ w + b).

    Args:
      xs:      (bs, D)  flattened inputs (bs, w*h), any float dtype.
      w:       (D,)     decision weights.
      b:       ()       decision bias.
      l_dists: (bs, K)  left-subtree output distributions  (l.forward(xs)[0]).
      r_dists: (bs, K)  right-subtree output distributions (r.forward(xs)[0]).
      pa:      optional (bs,) arrival probability; defaults to ones (as torch).

    Returns:
      (dists, node_attr): dists is (bs, K); node_attr mirrors the PyTorch attr
      dict with 'pa', 'ps', 'pa_l', 'pa_r', 'alpha'.
    """
    bs, d = xs.shape
    k = l_dists.shape[1]
    has_pa = pa is not None

    w2d = w.reshape(d, 1).astype(xs.dtype)    # match xs so the dot stays native
    b1 = jnp.asarray(b, dtype=jnp.float32).reshape(1)

    def _isz(a):
        return jnp.dtype(a.dtype).itemsize

    # Per-row VMEM footprint (inputs + output), x2 for double buffering.
    per_row = 2 * (d * _isz(xs)
                   + k * (_isz(l_dists) + _isz(r_dists))
                   + (_isz(pa) if has_pa else 0)
                   + 4 * (k + 3))
    tb = _pick_batch_tile(bs, per_row)
    grid = (pl.cdiv(bs, tb),)

    in_specs = [
        pl.BlockSpec((tb, d), lambda i: (i, 0)),                   # xs
        pl.BlockSpec((d, 1), lambda i: (0, 0)),                    # w (constant)
        pl.BlockSpec(memory_space=pltpu.MemorySpace.SMEM),         # b (scalar)
    ]
    args = [xs, w2d, b1]
    if has_pa:
        in_specs.append(pl.BlockSpec((tb, 1), lambda i: (i, 0)))   # pa
        args.append(pa.reshape(bs, 1))
    in_specs += [
        pl.BlockSpec((tb, k), lambda i: (i, 0)),                   # l_dists
        pl.BlockSpec((tb, k), lambda i: (i, 0)),                   # r_dists
    ]
    args += [l_dists, r_dists]

    out = pl.pallas_call(
        _make_branch_kernel(has_pa),
        out_shape=jax.ShapeDtypeStruct((bs, k + 3), jnp.float32),
        grid=grid,
        in_specs=in_specs,
        out_specs=pl.BlockSpec((tb, k + 3), lambda i: (i, 0)),
        compiler_params=pltpu.CompilerParams(
            dimension_semantics=("parallel",),
            vmem_limit_bytes=_VMEM_LIMIT_BYTES),
    )(*args)

    dists = out[:, :k]
    ps = out[:, k]
    pa_l = out[:, k + 1]
    pa_r = out[:, k + 2]
    if pa is None:
        pa = jnp.ones((bs,), dtype=jnp.float32)   # lazy; never round-trips HBM
    # Glue (scalar reduction), same as torch.sum(pa * ps) / torch.sum(pa).
    alpha = jnp.sum(pa * ps) / jnp.sum(pa)

    node_attr = {"pa": pa, "ps": ps, "pa_l": pa_l, "pa_r": pa_r, "alpha": alpha}
    return dists, node_attr


if __name__ == "__main__":
    key = jax.random.PRNGKey(0)
    kx, kw, kb, kl, kr, kp = jax.random.split(key, 6)

    bs, img_w, img_h = 2, 16, 16          # xs: (bs, w*h)
    d = img_w * img_h
    num_classes = 10

    xs = jax.random.normal(kx, (bs, d), dtype=jnp.float32)
    w = jax.random.normal(kw, (d,), dtype=jnp.float32) * 0.1
    b = jax.random.normal(kb, (), dtype=jnp.float32)

    # Minimal concrete children: two leaves whose distribution is
    # softmax(params) repeated over the batch (lazy broadcast; no kernel
    # needed for an identical-row broadcast).
    l_params = jax.random.normal(kl, (num_classes,), dtype=jnp.float32)
    r_params = jax.random.normal(kr, (num_classes,), dtype=jnp.float32)
    l_dists = jnp.broadcast_to(jax.nn.softmax(l_params)[None, :], (bs, num_classes))
    r_dists = jnp.broadcast_to(jax.nn.softmax(r_params)[None, :], (bs, num_classes))

    # Pure-JAX reference of Branch.forward with g = sigmoid(xs @ w + b).
    ps_ref = jax.nn.sigmoid(xs @ w + b)
    pa_ones = jnp.ones((bs,), dtype=jnp.float32)
    out_ref = (1.0 - ps_ref)[:, None] * l_dists + ps_ref[:, None] * r_dists
    alpha_ref = jnp.sum(pa_ones * ps_ref) / jnp.sum(pa_ones)

    # --- root-call path (pa defaults to ones; specialized kernel, no pa DMA) ---
    dists, attr = branch_forward(xs, w, b, l_dists, r_dists)
    dists = jax.block_until_ready(dists)

    assert dists.shape == (bs, num_classes)
    assert jnp.allclose(dists, out_ref, atol=1e-5)
    assert jnp.allclose(attr["ps"], ps_ref, atol=1e-5)
    assert jnp.allclose(attr["pa_l"], (1.0 - ps_ref), atol=1e-5)
    assert jnp.allclose(attr["pa_r"], ps_ref, atol=1e-5)
    assert jnp.allclose(attr["alpha"], alpha_ref, atol=1e-5)
    assert jnp.allclose(attr["pa"], pa_ones)

    # --- interior-node path (explicit arrival probability) ---
    pa_in = jax.random.uniform(kp, (bs,), dtype=jnp.float32, minval=0.1, maxval=1.0)
    dists2, attr2 = branch_forward(xs, w, b, l_dists, r_dists, pa=pa_in)
    dists2 = jax.block_until_ready(dists2)
    assert jnp.allclose(dists2, out_ref, atol=1e-5)   # mixing independent of pa
    assert jnp.allclose(attr2["ps"], ps_ref, atol=1e-5)
    assert jnp.allclose(attr2["pa_l"], (1.0 - ps_ref) * pa_in, atol=1e-5)
    assert jnp.allclose(attr2["pa_r"], ps_ref * pa_in, atol=1e-5)
    assert jnp.allclose(attr2["alpha"],
                        jnp.sum(pa_in * ps_ref) / jnp.sum(pa_in), atol=1e-5)

    print("KERNEL_OK")
</pallas_src>

<mosaic_0001>
module attributes {stable_mosaic.version = 11 : i64} {
  func.func @kernel(%arg0: i32, %arg1: memref<2x256xf32, #tpu.memory_space<vmem>>, %arg2: memref<256x1xf32, #tpu.memory_space<vmem>>, %arg3: memref<1xf32, #tpu.memory_space<smem>>, %arg4: memref<2x10xf32, #tpu.memory_space<vmem>>, %arg5: memref<2x10xf32, #tpu.memory_space<vmem>>, %arg6: memref<2x13xf32, #tpu.memory_space<vmem>>) attributes {dimension_semantics = [#tpu.dimension_semantics<parallel>], iteration_bounds = array<i64: 1>, scalar_prefetch = 0 : i64, scratch_operands = 0 : i64, tpu.core_type = #tpu.core_type<tc>, window_params = [{transform_indices = @transform_0, window_bounds = array<i64: 2, 256>}, {pipeline_mode = #tpu.pipeline_mode<synchronous>, transform_indices = @transform_1, window_bounds = array<i64: 256, 1>}, {transform_indices = @transform_2, window_bounds = array<i64: 1>}, {transform_indices = @transform_3, window_bounds = array<i64: 2, 10>}, {transform_indices = @transform_4, window_bounds = array<i64: 2, 10>}, {transform_indices = @transform_5, window_bounds = array<i64: 2, 13>}]} {
    %c0 = arith.constant 0 : index
    %c0_0 = arith.constant 0 : index
    %0 = vector.load %arg1[%c0, %c0_0] : memref<2x256xf32, #tpu.memory_space<vmem>>, vector<2x256xf32>
    %c0_1 = arith.constant 0 : index
    %c0_2 = arith.constant 0 : index
    %1 = vector.load %arg2[%c0_1, %c0_2] : memref<256x1xf32, #tpu.memory_space<vmem>>, vector<256x1xf32>
    %cst = arith.constant dense<0.000000e+00> : vector<2x1xf32>
    %2 = tpu.matmul %0, %1, %cst {dimension_numbers = #tpu.dot_dimension_numbers<[1], [0], [0], [1], [0, 0, 1, 1], [], []>} : vector<2x256xf32>, vector<256x1xf32>, vector<2x1xf32> -> vector<2x1xf32>
    %c0_3 = arith.constant 0 : index
    %3 = memref.load %arg3[%c0_3] : memref<1xf32, #tpu.memory_space<smem>>
    %4 = vector.broadcast %3 : f32 to vector<2x1xf32>
    %5 = arith.addf %2, %4 : vector<2x1xf32>
    %6 = arith.negf %5 : vector<2x1xf32>
    %7 = math.exp %6 : vector<2x1xf32>
    %cst_4 = arith.constant 1.000000e+00 : f32
    %8 = vector.broadcast %cst_4 : f32 to vector<2x1xf32>
    %9 = arith.addf %8, %7 : vector<2x1xf32>
    %10 = arith.divf %8, %9 : vector<2x1xf32>
    %cst_5 = arith.constant 1.000000e+00 : f32
    %11 = vector.broadcast %cst_5 : f32 to vector<2x1xf32>
    %12 = arith.subf %11, %10 : vector<2x1xf32>
    %c0_6 = arith.constant 0 : index
    %c0_7 = arith.constant 0 : index
    %13 = vector.load %arg4[%c0_6, %c0_7] : memref<2x10xf32, #tpu.memory_space<vmem>>, vector<2x10xf32>
    %14 = vector.broadcast %12 : vector<2x1xf32> to vector<2x10xf32>
    %15 = arith.mulf %14, %13 : vector<2x10xf32>
    %c0_8 = arith.constant 0 : index
    %c0_9 = arith.constant 0 : index
    %16 = vector.load %arg5[%c0_8, %c0_9] : memref<2x10xf32, #tpu.memory_space<vmem>>, vector<2x10xf32>
    %17 = vector.broadcast %10 : vector<2x1xf32> to vector<2x10xf32>
    %18 = arith.mulf %17, %16 : vector<2x10xf32>
    %19 = arith.addf %15, %18 : vector<2x10xf32>
    %20 = tpu.concatenate %19, %10, %12, %10 in 1 : vector<2x10xf32>, vector<2x1xf32>, vector<2x1xf32>, vector<2x1xf32> -> vector<2x13xf32>
    %c0_10 = arith.constant 0 : index
    %c0_11 = arith.constant 0 : index
    %21 = vector.load %arg6[%c0_10, %c0_11] : memref<2x13xf32, #tpu.memory_space<vmem>>, vector<2x13xf32>
    tpu.vector_store %arg6[%c0_10, %c0_11], %20 {strides = array<i32>} : memref<2x13xf32, #tpu.memory_space<vmem>>, vector<2x13xf32>,
    return
  }
  func.func @transform_0(%arg0: i32) -> (i32, i32) {
    %c0_i32 = arith.constant 0 : i32
    %c0_i32_0 = arith.constant 0 : i32
    return %arg0, %c0_i32 : i32, i32
  }
  func.func @transform_1(%arg0: i32) -> (i32, i32) {
    %c0_i32 = arith.constant 0 : i32
    %c0_i32_0 = arith.constant 0 : i32
    %c0_i32_1 = arith.constant 0 : i32
    return %c0_i32, %c0_i32_0 : i32, i32
  }
  func.func @transform_2(%arg0: i32) -> i32 {
    %c0_i32 = arith.constant 0 : i32
    %c0_i32_0 = arith.constant 0 : i32
    return %c0_i32 : i32
  }
  func.func @transform_3(%arg0: i32) -> (i32, i32) {
    %c0_i32 = arith.constant 0 : i32
    %c0_i32_0 = arith.constant 0 : i32
    return %arg0, %c0_i32 : i32, i32
  }
  func.func @transform_4(%arg0: i32) -> (i32, i32) {
    %c0_i32 = arith.constant 0 : i32
    %c0_i32_0 = arith.constant 0 : i32
    return %arg0, %c0_i32 : i32, i32
  }
  func.func @transform_5(%arg0: i32) -> (i32, i32) {
    %c0_i32 = arith.constant 0 : i32
    %c0_i32_0 = arith.constant 0 : i32
    return %arg0, %c0_i32 : i32, i32
  }
}

</mosaic_0001>

<llo_original>
// kernel: tpu_custom_call.1
$region0: #{tpu_custom_call.1}
  #allocation0 [shape = 'u32[]', space=smem, size = 0x4, offset = 0x4, fixed_abs, tag = 'smem constant byte address 0x4 - core index']
  #allocation1 [shape = 'u32[144,128]{1,0:T(1,128)}', space=vmem, size = 0x12000, scoped, tag = 'internal scratch']
  #allocation2 [shape = 'f32[1]{0:T(128)S(6)}', space=smem, size = 0x200, scoped, tag = 'scoped memory for tpu_custom_call.1']
  %s0 = inlined_call_operand.vmem [shape: f32[2,256], index: 0, kind: input, shape index: {}]
  %s1 = inlined_call_operand.vmem [shape: f32[256,1], index: 1, kind: input, shape index: {}]
  %s2 = inlined_call_operand.<no memory space> [shape: f32[1], index: 2, kind: input, shape index: {}]
  %s3 = inlined_call_operand.vmem [shape: f32[2,10], index: 3, kind: input, shape index: {}]
  %s4 = inlined_call_operand.vmem [shape: f32[2,10], index: 4, kind: input, shape index: {}]
  %s5 = inlined_call_operand.hbm [shape: f32[2,13], index: 5, kind: output, shape index: {}]
  %s6 = sld [smem:[#allocation0]]
  $region30: #{tpu_custom_call.1} parent=0
    _
  %s8 = ssub.s32 1, %s6
  %s9 = scalar_select 0, %s8, %s6
  %10 = sst [smem:[#allocation2]] %s2
  $region1: #{tpu_custom_call.1} parent=0
    #allocation3 [shape = 'u8[1024]{0}', space=vmem, size = 0x400, scoped, tag = 'output window, operand 0, single buffered']
    #allocation4 [shape = 's32[1]{0}', space=sflag, size = 0x4, scoped, tag = 'scoped memory for tpu_custom_call.1']
    %11 = vsyncpa [#allocation4], 0
    // Predicated region
    $region2: #{tpu_custom_call.1} parent=1 // pred_check
      _
    $region3: #{tpu_custom_call.1} parent=1 // pred_check_branch
      %13 = sbr.rel (0) target = $region5
    $region4: #{tpu_custom_call.1} parent=1 // pred_region
      _
    $region5: #{tpu_custom_call.1} parent=1 // pred_fallthru
      _
    // Predicated region
    $region6: #{tpu_custom_call.1} parent=1 // pred_check
      _
    $region7: #{tpu_custom_call.1} parent=1 // pred_check_branch
      %15 = sbr.rel (0) target = $region9
    $region8: #{tpu_custom_call.1} parent=1 // pred_region
      _
    $region9: #{tpu_custom_call.1} parent=1 // pred_fallthru
      _
    // Predicated region
    $region10: #{tpu_custom_call.1} parent=1 // pred_check
      _
    $region11: #{tpu_custom_call.1} parent=1 // pred_check_branch
      %17 = sbr.rel (0) target = $region13
    $region12: #{tpu_custom_call.1} parent=1 // pred_region
      _
    $region13: #{tpu_custom_call.1} parent=1 // pred_fallthru
      _
    // Predicated region
    $region14: #{tpu_custom_call.1} parent=1 // pred_check
      _
    $region15: #{tpu_custom_call.1} parent=1 // pred_check_branch
      %19 = sbr.rel (0) target = $region17
    $region16: #{tpu_custom_call.1} parent=1 // pred_region
      _
    $region17: #{tpu_custom_call.1} parent=1 // pred_fallthru
      _
    // Predicated region
    $region18: #{tpu_custom_call.1} parent=1 // pred_check
      _
    $region19: #{tpu_custom_call.1} parent=1 // pred_check_branch
      %21 = sbr.rel (0) target = $region21
    $region20: #{tpu_custom_call.1} parent=1 // pred_region
      _
    $region21: #{tpu_custom_call.1} parent=1 // pred_fallthru
      _
    %v22 = vld [vmem:[%s0] sm:$0xf]
    %v23 = vld [vmem:[%s1] sm:$0xff]
    %v24 = vld [vmem:[%s1 + $0x8] sm:$0xff]
    %v25 = vld [vmem:[%s1 + $0x10] sm:$0xff]
    %v26 = vld [vmem:[%s1 + $0x18] sm:$0xff]
    %v27 = vld [vmem:[%s1 + $0x20] sm:$0xff]
    %v28 = vld [vmem:[%s1 + $0x28] sm:$0xff]
    %v29 = vld [vmem:[%s1 + $0x30] sm:$0xff]
    %v30 = vld [vmem:[%s1 + $0x38] sm:$0xff]
    %v31 = vld [vmem:[%s1 + $0x40] sm:$0xff]
    %v32 = vld [vmem:[%s1 + $0x48] sm:$0xff]
    %v33 = vld [vmem:[%s1 + $0x50] sm:$0xff]
    %v34 = vld [vmem:[%s1 + $0x58] sm:$0xff]
    %v35 = vld [vmem:[%s1 + $0x60] sm:$0xff]
    %v36 = vld [vmem:[%s1 + $0x68] sm:$0xff]
    %v37 = vld [vmem:[%s1 + $0x70] sm:$0xff]
    %v38 = vld [vmem:[%s1 + $0x78] sm:$0xff]
    %v39 = vld [vmem:[%s1 + $0x80] sm:$0xff]
    %v40 = vld [vmem:[%s1 + $0x88] sm:$0xff]
    %v41 = vld [vmem:[%s1 + $0x90] sm:$0xff]
    %v42 = vld [vmem:[%s1 + $0x98] sm:$0xff]
    %v43 = vld [vmem:[%s1 + $0xa0] sm:$0xff]
    %v44 = vld [vmem:[%s1 + $0xa8] sm:$0xff]
    %v45 = vld [vmem:[%s1 + $0xb0] sm:$0xff]
    %v46 = vld [vmem:[%s1 + $0xb8] sm:$0xff]
    %v47 = vld [vmem:[%s1 + $0xc0] sm:$0xff]
    %v48 = vld [vmem:[%s1 + $0xc8] sm:$0xff]
    %v49 = vld [vmem:[%s1 + $0xd0] sm:$0xff]
    %v50 = vld [vmem:[%s1 + $0xd8] sm:$0xff]
    %v51 = vld [vmem:[%s1 + $0xe0] sm:$0xff]
    %v52 = vld [vmem:[%s1 + $0xe8] sm:$0xff]
    %v53 = vld [vmem:[%s1 + $0xf0] sm:$0xff]
    %v54 = vld [vmem:[%s1 + $0xf8] sm:$0xff]
    %s55 = sld [smem:[#allocation2]]
    %v56 = vstv %s55
    %v59 = vunpack.c.l.s4 1983009808
    %v60 = vunpack.c.0.s8 %v59
    %v61 = vlaneseq
    %v62 = vshrl.u32 %v61, 7
    %v63 = vsub.s32 %v60, %v62
    %v64 = vrot.slane %v22, %v63
    %v65 = vcombine.high %v64, %v64
    %68 = vmatprep.subr.mxu0 0.0
    %69 = vmatpush1.msra.mxu0 %v23
    %70 = vmatprep.subr.mxu0 0.0
    %71 = vmatpush1.msra.mxu0 %v24
    %72 = vmatprep.subr.mxu0 0.0
    %73 = vmatpush1.msra.mxu0 %v25
    %74 = vmatprep.subr.mxu0 0.0
    %75 = vmatpush1.msra.mxu0 %v26
    %76 = vmatprep.subr.mxu0 0.0
    %77 = vmatpush1.msra.mxu0 %v27
    %78 = vmatprep.subr.mxu0 0.0
    %79 = vmatpush1.msra.mxu0 %v28
    %80 = vmatprep.subr.mxu0 0.0
    %81 = vmatpush1.msra.mxu0 %v29
    %82 = vmatprep.subr.mxu0 0.0
    %83 = vmatpush1.msra.mxu0 %v30
    %84 = vmatprep.subr.mxu0 0.0
    %85 = vmatpush1.msra.mxu0 %v31
    %86 = vmatprep.subr.mxu0 0.0
    %87 = vmatpush1.msra.mxu0 %v32
    %88 = vmatprep.subr.mxu0 0.0
    %89 = vmatpush1.msra.mxu0 %v33
    %90 = vmatprep.subr.mxu0 0.0
    %91 = vmatpush1.msra.mxu0 %v34
    %92 = vmatprep.subr.mxu0 0.0
    %93 = vmatpush1.msra.mxu0 %v35
    %94 = vmatprep.subr.mxu0 0.0
    %95 = vmatpush1.msra.mxu0 %v36
    %96 = vmatprep.subr.mxu0 0.0
    %97 = vmatpush1.msra.mxu0 %v37
    %98 = vmatprep.subr.mxu0 0.0
    %99 = vmatpush1.msra.mxu0 %v38
    %100 = vmatprep.subr.mxu0 0.0
    %101 = vmatpush1.msra.mxu0 %v39
    %102 = vmatprep.subr.mxu0 0.0
    %103 = vmatpush1.msra.mxu0 %v40
    %104 = vmatprep.subr.mxu0 0.0
    %105 = vmatpush1.msra.mxu0 %v41
    %106 = vmatprep.subr.mxu0 0.0
    %107 = vmatpush1.msra.mxu0 %v42
    %108 = vmatprep.subr.mxu0 0.0
    %109 = vmatpush1.msra.mxu0 %v43
    %110 = vmatprep.subr.mxu0 0.0
    %111 = vmatpush1.msra.mxu0 %v44
    %112 = vmatprep.subr.mxu0 0.0
    %113 = vmatpush1.msra.mxu0 %v45
    %114 = vmatprep.subr.mxu0 0.0
    %115 = vmatpush1.msra.mxu0 %v46
    %116 = vmatprep.subr.mxu0 0.0
    %117 = vmatpush1.msra.mxu0 %v47
    %118 = vmatprep.subr.mxu0 0.0
    %119 = vmatpush1.msra.mxu0 %v48
    %120 = vmatprep.subr.mxu0 0.0
    %121 = vmatpush1.msra.mxu0 %v49
    %122 = vmatprep.subr.mxu0 0.0
    %123 = vmatpush1.msra.mxu0 %v50
    %124 = vmatprep.subr.mxu0 0.0
    %125 = vmatpush1.msra.mxu0 %v51
    %126 = vmatprep.subr.mxu0 0.0
    %127 = vmatpush1.msra.mxu0 %v52
    %128 = vmatprep.subr.mxu0 0.0
    %129 = vmatpush1.msra.mxu0 %v53
    %130 = vmatprep.subr.mxu0 0.0
    %131 = vmatpush1.msra.mxu0 %v54
    %132 = vmatprep.mubr.f32.mxu0 %v65
    %133 = vmatmul.mubr.f32.gmra.mrb[0].mxu0 %v64
    %v134 = vpop.f32.mrb[0].mxu0
    %v135 = vadd.f32 %v56, %v134
    %v136 = vpop.f32.mrb[0].mxu0
    %137 = vdwg.mxu0
    %v138 = vxor.u32 %v135, 2147483648
    %v139 = vmul.f32 %v138, 1.442695
    %v140 = vpow.pop %v139
    %v141 = vadd.f32 %v140, 1.0
    %v142 = vrcp.pop %v141
    %v143 = vmul.f32 1.0, %v142
    %v144 = vsub.f32 1.0, %v143
    %v145 = vld [vmem:[%s3] sm:$0x3]
    %147 = vset.pattern.permute.xlu0 0
    %148 = vperm.xlu0 %147, %v144
    %v149 = vpop.permute.xlu0 %148
    %v151 = vmul.f32 %v149, %v145
    %v152 = vld [vmem:[%s4] sm:$0x3]
    %154 = vset.pattern.permute.xlu0 0
    %155 = vperm.xlu0 %154, %v143
    %v156 = vpop.permute.xlu0 %155
    %v158 = vmul.f32 %v156, %v152
    %v159 = vadd.f32 %v151, %v158
    %160 = vrot.lane.b32.xlu0 %v143, 10
    %v161 = vpop.permute.xlu0 %160
    %163 = vrot.lane.b32.xlu0 %v144, 11
    %v164 = vpop.permute.xlu0 %163
    %166 = vrot.lane.b32.xlu0 %v143, 12
    %v167 = vpop.permute.xlu0 %166
    %vm169 = vcmask 80896
    %v170 = vsel %vm169, %v159, %v161
    %vm171 = vcmask 89088
    %v172 = vsel %vm171, %v170, %v164
    %vm173 = vcmask 97280
    %v174 = vsel %vm173, %v172, %v167
    %vm175 = vcmask 99328
    %176 = vst.msk [vmem:[#allocation3] sm:$0x3] %vm175, %v174
    // Predicated region
    $region22: #{tpu_custom_call.1} parent=1 // pred_check
      _
    $region23: #{tpu_custom_call.1} parent=1 // pred_check_branch
      %178 = sbr.rel (0) target = $region25
    $region24: #{tpu_custom_call.1} parent=1 // pred_region
      %s180 = ssub.s32 32, 32
      %181 = vsyncadd [#allocation4], %s180
      %s183 = sshll.u32 [#allocation3], 4
      %s184 = int_to_ptr.vmem [resolvable:$true] %s183
      %186 = dma.vmem_to_hbm [thread:$0]  %s184, 32, %s5, [#allocation4]
    $region25: #{tpu_custom_call.1} parent=1 // pred_fallthru
      _
    // Predicated region
    $region26: #{tpu_custom_call.1} parent=1 // pred_check
      _
    $region27: #{tpu_custom_call.1} parent=1 // pred_check_branch
      %188 = sbr.rel (0) target = $region29
    $region28: #{tpu_custom_call.1} parent=1 // pred_region
      %189 = dma.done [#allocation4], 32
    $region29: #{tpu_custom_call.1} parent=1 // pred_fallthru
      _
    %190 = vsyncpa [#allocation4], 1

</llo_original>
